<compile_context>
chip_gen: v5e
topology: v5e:2x2
jax: 0.10.0
libtpu: 0.0.40
codegen_flags: <defaults>
</compile_context>

<pallas_src>
import jax
import jax.numpy as jnp
from jax.experimental import pallas as pl
from jax.experimental.pallas import tpu as pltpu
import numpy as np


# --------------------------------------------------------------------------- #
# Kernel
# --------------------------------------------------------------------------- #
def _multi_scale_kernel(x_ref, b1_ref, b2_ref, bias1_ref, bias2_ref,
                        mdn_ref, mup_ref, o_ref, xp2_ref):
    """Fused [3x3 conv -> folded-BN bias -> ReLU] x 2 over the stacked batch.

    x_ref:     (N*H + 2, W*Cin)    f32 stacked input rows, one zero row top+bottom
    b1_ref:    (3, W*Cin, W*Cout)  bf16 banded layer-1 weights (BN scale folded in)
    b2_ref:    (3, W*Cout, W*Cout) bf16 banded layer-2 weights (BN scale folded in)
    bias1_ref: (1, W*Cout)         f32 folded BN bias, tiled over W
    bias2_ref: (1, W*Cout)
    mdn_ref:   (N*H, W*Cout)       0/1 mask: zero where the row above crosses an image
    mup_ref:   (N*H, W*Cout)       0/1 mask: zero where the row below crosses an image
    o_ref:     (N*H, W*Cout)       f32 lane-dense output rows
    xp2_ref:   VMEM (N*H + 2, W*Cout) staging for the layer-2 input (zero-bordered)
    """
    nh = o_ref.shape[0]
    mdn = mdn_ref[...]
    mup = mup_ref[...]

    def conv3x3(xp_ref, b_ref, bias_ref):
        # xp_ref rows 0 and nh+1 are zero padding; row m+1 holds stacked row m.
        # Three row-shifted slices -> three big-M MXU pushes (bf16 operands,
        # f32 accumulation).  Masks fix per-image boundary rows post-dot.
        x_dn = xp_ref[0:nh, :].astype(jnp.bfloat16)        # row above  (ky = 0)
        x_c = xp_ref[1:nh + 1, :].astype(jnp.bfloat16)     # centre row (ky = 1)
        x_up = xp_ref[2:nh + 2, :].astype(jnp.bfloat16)    # row below  (ky = 2)
        acc = jnp.dot(x_c, b_ref[1], preferred_element_type=jnp.float32)
        acc = acc + mdn * jnp.dot(x_dn, b_ref[0],
                                  preferred_element_type=jnp.float32)
        acc = acc + mup * jnp.dot(x_up, b_ref[2],
                                  preferred_element_type=jnp.float32)
        return jnp.maximum(acc + bias_ref[...], 0.0)        # f32 epilogue (v5e VPU)

    # ---- layer 1: input already zero-padded in H by the wrapper ----
    y1 = conv3x3(x_ref, b1_ref, bias1_ref)                  # (N*H, W*Cout) f32

    # ---- layer 2: intermediate never leaves VMEM; stage with zero border rows
    #      so the same shifted-ref-slice pattern applies ----
    zrow = jnp.zeros((1, xp2_ref.shape[1]), jnp.float32)
    xp2_ref[0:1, :] = zrow
    xp2_ref[nh + 1:nh + 2, :] = zrow
    xp2_ref[1:nh + 1, :] = y1

    o_ref[...] = conv3x3(xp2_ref, b2_ref, bias2_ref).astype(o_ref.dtype)


def _fused_multi_scale_call(x_slab, B1, B2, bias1, bias2, mdn, mup):
    """x_slab: (N*H + 2, W*Cin) f32 -> (N*H, W*Cout) f32 in a single grid step."""
    NHp2, WCin = x_slab.shape
    NH = NHp2 - 2
    WCout = B1.shape[2]

    flops = 6 * NH * WCout * (WCin + WCout)                 # 3 taps x 2 layers
    bytes_accessed = (x_slab.size * 4 + B1.size * 2 + B2.size * 2
                      + bias1.size * 4 + bias2.size * 4
                      + mdn.size * 4 + mup.size * 4 + NH * WCout * 4)

    return pl.pallas_call(
        _multi_scale_kernel,
        out_shape=jax.ShapeDtypeStruct((NH, WCout), jnp.float32),
        grid_spec=pltpu.PrefetchScalarGridSpec(
            num_scalar_prefetch=0,
            grid=(1,),            # whole batch in one step: big-M MXU pushes
            in_specs=[
                pl.BlockSpec((NHp2, WCin), lambda i: (0, 0)),
                pl.BlockSpec(B1.shape, lambda i: (0, 0, 0)),
                pl.BlockSpec(B2.shape, lambda i: (0, 0, 0)),
                pl.BlockSpec((1, WCout), lambda i: (0, 0)),
                pl.BlockSpec((1, WCout), lambda i: (0, 0)),
                pl.BlockSpec((NH, WCout), lambda i: (0, 0)),
                pl.BlockSpec((NH, WCout), lambda i: (0, 0)),
            ],
            out_specs=pl.BlockSpec((NH, WCout), lambda i: (0, 0)),
            scratch_shapes=[pltpu.VMEM((NH + 2, WCout), jnp.float32)],
        ),
        compiler_params=pltpu.CompilerParams(
            dimension_semantics=("arbitrary",),
        ),
        cost_estimate=pl.CostEstimate(
            flops=flops, transcendentals=0, bytes_accessed=bytes_accessed),
    )(x_slab, B1, B2, bias1, bias2, mdn, mup)


# --------------------------------------------------------------------------- #
# Host-side weight preparation (done once, outside jit)
# --------------------------------------------------------------------------- #
def _fold_bn_np(gamma, beta, mean, var, eps=1e-5):
    scale = np.asarray(gamma, np.float32) / np.sqrt(np.asarray(var, np.float32) + eps)
    bias = np.asarray(beta, np.float32) - np.asarray(mean, np.float32) * scale
    return scale, bias


def _build_banded_weights_np(w_hwio, bn_scale, W):
    """Fold BN scale into w and build per-ky banded matmul weights.

    B[ky, wi*Cin + ci, wo*Cout + co] = w[ky, kx, ci, co] * scale[co]
    with wi = wo + kx - 1 when it lies in [0, W); the missing (zero) bands encode
    the W-direction 'same' padding, so only H needs explicit zero rows.
    """
    ws = (np.asarray(w_hwio, np.float32)
          * np.asarray(bn_scale, np.float32)[None, None, None, :])
    KH, KW, Cin, Cout = ws.shape
    B = np.zeros((KH, W, Cin, W, Cout), np.float32)
    for kx in range(KW):
        for wo in range(W):
            wi = wo + kx - 1
            if 0 <= wi < W:
                B[:, wi, :, wo, :] += ws[:, kx, :, :]
    return B.reshape(KH, W * Cin, W * Cout)


def prepare_multi_scale(params, W):
    """BN fold + banded-matmul weight build, once on the host.

    Conv weights in `params` are OIHW (PyTorch layout).  Returns bf16 banded
    weights (MXU operands) and f32 folded biases tiled to the dense layout.
    """
    w1 = np.transpose(np.asarray(params["w1"], np.float32), (2, 3, 1, 0))  # HWIO
    w2 = np.transpose(np.asarray(params["w2"], np.float32), (2, 3, 1, 0))
    cin1, cout = w1.shape[2], w1.shape[3]

    # Pad input channels up to a multiple of 8 so W*Cin is lane-aligned
    # (7 -> 8 here makes the layer-1 K exactly 128; extra rows are zero).
    cin_pad = int(-(-cin1 // 8) * 8)
    w1p = np.zeros((3, 3, cin_pad, cout), np.float32)
    w1p[:, :, :cin1, :] = w1

    s1, b1 = _fold_bn_np(params["bn1_gamma"], params["bn1_beta"],
                         params["bn1_mean"], params["bn1_var"])
    s2, b2 = _fold_bn_np(params["bn2_gamma"], params["bn2_beta"],
                         params["bn2_mean"], params["bn2_var"])

    return {
        "B1": jnp.asarray(_build_banded_weights_np(w1p, s1, W), jnp.bfloat16),
        "B2": jnp.asarray(_build_banded_weights_np(w2, s2, W), jnp.bfloat16),
        "bias1": jnp.asarray(np.tile(b1, W)[None, :], jnp.float32),
        "bias2": jnp.asarray(np.tile(b2, W)[None, :], jnp.float32),
    }


# --------------------------------------------------------------------------- #
# Forward pass (jit-able)
# --------------------------------------------------------------------------- #
def multi_scale_forward(x, x_scale, prep):
    """Equivalent of Multi_Scale.forward (inference-mode BN).

    x:       (N, C_in, H, W)
    x_scale: (N, 3,    H, W)
    prep:    output of prepare_multi_scale(params, W)
    returns: (N, C_out, H, W)
    """
    B1, B2 = prep["B1"], prep["B2"]
    bias1, bias2 = prep["bias1"], prep["bias2"]
    N, _, H, W = x.shape
    WCin, WCout = B1.shape[1], B1.shape[2]
    cin_pad, cout = WCin // W, WCout // W
    cin1 = x.shape[1] + x_scale.shape[1]

    # concat + NCHW -> NHWC + zero-pad channels to cin_pad (layout plumbing that
    # XLA fuses into a single relayout).
    x_cat = jnp.concatenate([x, x_scale], axis=1)
    x_nhwc = jnp.transpose(x_cat, (0, 2, 3, 1)).astype(jnp.float32)
    if cin_pad > cin1:
        x_nhwc = jnp.pad(x_nhwc, ((0, 0), (0, 0), (0, 0), (0, cin_pad - cin1)))

    # Stack all images' rows and add ONE zero row top+bottom ('same' H padding for
    # the whole stack); per-image H boundaries are fixed by the masks below.
    x_slab = jnp.pad(x_nhwc.reshape(N * H, W * cin_pad), ((1, 1), (0, 0)))

    NH = N * H
    rows = np.arange(NH)
    mdn = jnp.asarray(np.repeat(
        (rows % H != 0).astype(np.float32)[:, None], WCout, axis=1))
    mup = jnp.asarray(np.repeat(
        (rows % H != H - 1).astype(np.float32)[:, None], WCout, axis=1))

    y_slab = _fused_multi_scale_call(x_slab, B1, B2, bias1, bias2, mdn, mup)
    y = y_slab.reshape(N, H, W, cout)
    return jnp.transpose(y, (0, 3, 1, 2))                   # back to NCHW


# --------------------------------------------------------------------------- #
# Pure-JAX f32 reference + synthetic params
# --------------------------------------------------------------------------- #
def _reference_forward(x, x_scale, params):
    xc = jnp.concatenate([x, x_scale], axis=1)
    h = jnp.transpose(xc, (0, 2, 3, 1)).astype(jnp.float32)

    def layer(h, w_oihw, gamma, beta, mean, var, eps=1e-5):
        w = jnp.transpose(w_oihw, (2, 3, 1, 0))
        y = jax.lax.conv_general_dilated(
            h, w, window_strides=(1, 1), padding="SAME",
            dimension_numbers=("NHWC", "HWIO", "NHWC"))
        s = gamma / jnp.sqrt(var + eps)
        b = beta - mean * s
        return jnp.maximum(y * s + b, 0.0)

    h = layer(h, params["w1"], params["bn1_gamma"], params["bn1_beta"],
              params["bn1_mean"], params["bn1_var"])
    h = layer(h, params["w2"], params["bn2_gamma"], params["bn2_beta"],
              params["bn2_mean"], params["bn2_var"])
    return jnp.transpose(h, (0, 3, 1, 2))


def make_params(key, in_channels, out_channels):
    """Deterministic synthetic parameters. Conv weights are OIHW (PyTorch layout)."""
    cin1 = in_channels + 3
    k = jax.random.split(key, 8)
    w1 = jax.random.normal(k[0], (out_channels, cin1, 3, 3), jnp.float32) * (
        1.0 / np.sqrt(9 * cin1))
    w2 = jax.random.normal(k[1], (out_channels, out_channels, 3, 3),
                           jnp.float32) * (1.0 / np.sqrt(9 * out_channels))
    params = {
        "w1": w1,
        "w2": w2,
        "bn1_gamma": 1.0 + 0.1 * jax.random.normal(k[2], (out_channels,)),
        "bn1_beta": 0.1 * jax.random.normal(k[3], (out_channels,)),
        "bn1_mean": 0.05 * jax.random.normal(k[4], (out_channels,)),
        "bn1_var": jnp.abs(1.0 + 0.1 * jax.random.normal(k[5], (out_channels,))),
        "bn2_gamma": 1.0 + 0.1 * jax.random.normal(k[6], (out_channels,)),
        "bn2_beta": 0.1 * jax.random.normal(k[7], (out_channels,)),
        "bn2_mean": jnp.zeros((out_channels,), jnp.float32),
        "bn2_var": jnp.ones((out_channels,), jnp.float32),
    }
    return {n: v.astype(jnp.float32) for n, v in params.items()}


if __name__ == "__main__":
    N, C_in, C_out, H, W = 2, 4, 8, 16, 16   # W*C_out = 128 -> fully lane-dense output

    key = jax.random.PRNGKey(0)
    kx, ks, kp = jax.random.split(key, 3)
    x = jax.random.normal(kx, (N, C_in, H, W), jnp.float32)
    x_scale = jax.random.normal(ks, (N, 3, H, W), jnp.float32)
    params = make_params(kp, C_in, C_out)

    prep = prepare_multi_scale(params, W)    # host-side, once (not per call)
    fwd = jax.jit(multi_scale_forward)
    out = jax.block_until_ready(fwd(x, x_scale, prep))

    ref = jax.block_until_ready(_reference_forward(x, x_scale, params))
    assert out.shape == (N, C_out, H, W)
    # bf16 MXU operands (f32 accumulate) vs a full-f32 reference: tolerance widened
    # per the review; structural bugs would produce O(1) errors and still fail.
    np.testing.assert_allclose(np.asarray(out), np.asarray(ref),
                               rtol=5e-2, atol=5e-2)

    print("KERNEL_OK")
</pallas_src>

<mosaic_0001>
module attributes {stable_mosaic.version = 11 : i64} {
  func.func @_multi_scale_kernel(%arg0: i32, %arg1: memref<34x128xf32, #tpu.memory_space<vmem>>, %arg2: memref<3x128x128xbf16, #tpu.memory_space<vmem>>, %arg3: memref<3x128x128xbf16, #tpu.memory_space<vmem>>, %arg4: memref<1x128xf32, #tpu.memory_space<vmem>>, %arg5: memref<1x128xf32, #tpu.memory_space<vmem>>, %arg6: memref<32x128xf32, #tpu.memory_space<vmem>>, %arg7: memref<32x128xf32, #tpu.memory_space<vmem>>, %arg8: memref<32x128xf32, #tpu.memory_space<vmem>>, %arg9: memref<34x128xf32, #tpu.memory_space<vmem>>) attributes {dimension_semantics = [#tpu.dimension_semantics<arbitrary>], iteration_bounds = array<i64: 1>, scalar_prefetch = 0 : i64, scratch_operands = 1 : i64, tpu.core_type = #tpu.core_type<tc>, window_params = [{pipeline_mode = #tpu.pipeline_mode<synchronous>, transform_indices = @transform_0, window_bounds = array<i64: 34, 128>}, {pipeline_mode = #tpu.pipeline_mode<synchronous>, transform_indices = @transform_1, window_bounds = array<i64: 3, 128, 128>}, {pipeline_mode = #tpu.pipeline_mode<synchronous>, transform_indices = @transform_2, window_bounds = array<i64: 3, 128, 128>}, {pipeline_mode = #tpu.pipeline_mode<synchronous>, transform_indices = @transform_3, window_bounds = array<i64: 1, 128>}, {pipeline_mode = #tpu.pipeline_mode<synchronous>, transform_indices = @transform_4, window_bounds = array<i64: 1, 128>}, {pipeline_mode = #tpu.pipeline_mode<synchronous>, transform_indices = @transform_5, window_bounds = array<i64: 32, 128>}, {pipeline_mode = #tpu.pipeline_mode<synchronous>, transform_indices = @transform_6, window_bounds = array<i64: 32, 128>}, {pipeline_mode = #tpu.pipeline_mode<synchronous>, transform_indices = @transform_7, window_bounds = array<i64: 32, 128>}]} {
    %c0 = arith.constant 0 : index
    %c0_0 = arith.constant 0 : index
    %0 = vector.load %arg6[%c0, %c0_0] : memref<32x128xf32, #tpu.memory_space<vmem>>, vector<32x128xf32>
    %c0_1 = arith.constant 0 : index
    %c0_2 = arith.constant 0 : index
    %1 = vector.load %arg7[%c0_1, %c0_2] : memref<32x128xf32, #tpu.memory_space<vmem>>, vector<32x128xf32>
    %c0_3 = arith.constant 0 : index
    %c0_4 = arith.constant 0 : index
    %2 = vector.load %arg1[%c0_3, %c0_4] : memref<34x128xf32, #tpu.memory_space<vmem>>, vector<32x128xf32>
    %3 = arith.truncf %2 : vector<32x128xf32> to vector<32x128xbf16>
    %c1 = arith.constant 1 : index
    %c0_5 = arith.constant 0 : index
    %4 = vector.load %arg1[%c1, %c0_5] : memref<34x128xf32, #tpu.memory_space<vmem>>, vector<32x128xf32>
    %5 = arith.truncf %4 : vector<32x128xf32> to vector<32x128xbf16>
    %c2 = arith.constant 2 : index
    %c0_6 = arith.constant 0 : index
    %6 = vector.load %arg1[%c2, %c0_6] : memref<34x128xf32, #tpu.memory_space<vmem>>, vector<32x128xf32>
    %7 = arith.truncf %6 : vector<32x128xf32> to vector<32x128xbf16>
    %c1_7 = arith.constant 1 : index
    %c0_8 = arith.constant 0 : index
    %c0_9 = arith.constant 0 : index
    %8 = vector.load %arg2[%c1_7, %c0_8, %c0_9] : memref<3x128x128xbf16, #tpu.memory_space<vmem>>, vector<1x128x128xbf16>
    %9 = vector.shape_cast %8 : vector<1x128x128xbf16> to vector<128x128xbf16>
    %cst = arith.constant dense<0.000000e+00> : vector<32x128xf32>
    %10 = tpu.matmul %5, %9, %cst {dimension_numbers = #tpu.dot_dimension_numbers<[1], [0], [0], [1], [0, 0, 1, 1], [], []>} : vector<32x128xbf16>, vector<128x128xbf16>, vector<32x128xf32> -> vector<32x128xf32>
    %c0_10 = arith.constant 0 : index
    %c0_11 = arith.constant 0 : index
    %c0_12 = arith.constant 0 : index
    %11 = vector.load %arg2[%c0_10, %c0_11, %c0_12] : memref<3x128x128xbf16, #tpu.memory_space<vmem>>, vector<1x128x128xbf16>
    %12 = vector.shape_cast %11 : vector<1x128x128xbf16> to vector<128x128xbf16>
    %cst_13 = arith.constant dense<0.000000e+00> : vector<32x128xf32>
    %13 = tpu.matmul %3, %12, %cst_13 {dimension_numbers = #tpu.dot_dimension_numbers<[1], [0], [0], [1], [0, 0, 1, 1], [], []>} : vector<32x128xbf16>, vector<128x128xbf16>, vector<32x128xf32> -> vector<32x128xf32>
    %14 = arith.mulf %0, %13 : vector<32x128xf32>
    %15 = arith.addf %10, %14 : vector<32x128xf32>
    %c2_14 = arith.constant 2 : index
    %c0_15 = arith.constant 0 : index
    %c0_16 = arith.constant 0 : index
    %16 = vector.load %arg2[%c2_14, %c0_15, %c0_16] : memref<3x128x128xbf16, #tpu.memory_space<vmem>>, vector<1x128x128xbf16>
    %17 = vector.shape_cast %16 : vector<1x128x128xbf16> to vector<128x128xbf16>
    %cst_17 = arith.constant dense<0.000000e+00> : vector<32x128xf32>
    %18 = tpu.matmul %7, %17, %cst_17 {dimension_numbers = #tpu.dot_dimension_numbers<[1], [0], [0], [1], [0, 0, 1, 1], [], []>} : vector<32x128xbf16>, vector<128x128xbf16>, vector<32x128xf32> -> vector<32x128xf32>
    %19 = arith.mulf %1, %18 : vector<32x128xf32>
    %20 = arith.addf %15, %19 : vector<32x128xf32>
    %c0_18 = arith.constant 0 : index
    %c0_19 = arith.constant 0 : index
    %21 = vector.load %arg4[%c0_18, %c0_19] : memref<1x128xf32, #tpu.memory_space<vmem>>, vector<1x128xf32>
    %22 = vector.broadcast %21 : vector<1x128xf32> to vector<32x128xf32>
    %23 = arith.addf %20, %22 : vector<32x128xf32>
    %cst_20 = arith.constant 0.000000e+00 : f32
    %24 = vector.broadcast %cst_20 : f32 to vector<32x128xf32>
    %25 = arith.maximumf %23, %24 : vector<32x128xf32>
    %cst_21 = arith.constant 0.000000e+00 : f32
    %26 = vector.broadcast %cst_21 : f32 to vector<1x128xf32>
    %c0_22 = arith.constant 0 : index
    %c0_23 = arith.constant 0 : index
    %27 = vector.load %arg9[%c0_22, %c0_23] : memref<34x128xf32, #tpu.memory_space<vmem>>, vector<1x128xf32>
    tpu.vector_store %arg9[%c0_22, %c0_23], %26 {strides = array<i32>} : memref<34x128xf32, #tpu.memory_space<vmem>>, vector<1x128xf32>,
    %c33 = arith.constant 33 : index
    %c0_24 = arith.constant 0 : index
    %28 = vector.load %arg9[%c33, %c0_24] : memref<34x128xf32, #tpu.memory_space<vmem>>, vector<1x128xf32>
    tpu.vector_store %arg9[%c33, %c0_24], %26 {strides = array<i32>} : memref<34x128xf32, #tpu.memory_space<vmem>>, vector<1x128xf32>,
    %c1_25 = arith.constant 1 : index
    %c0_26 = arith.constant 0 : index
    %29 = vector.load %arg9[%c1_25, %c0_26] : memref<34x128xf32, #tpu.memory_space<vmem>>, vector<32x128xf32>
    tpu.vector_store %arg9[%c1_25, %c0_26], %25 {strides = array<i32>} : memref<34x128xf32, #tpu.memory_space<vmem>>, vector<32x128xf32>,
    %c0_27 = arith.constant 0 : index
    %c0_28 = arith.constant 0 : index
    %30 = vector.load %arg9[%c0_27, %c0_28] : memref<34x128xf32, #tpu.memory_space<vmem>>, vector<32x128xf32>
    %31 = arith.truncf %30 : vector<32x128xf32> to vector<32x128xbf16>
    %c1_29 = arith.constant 1 : index
    %c0_30 = arith.constant 0 : index
    %32 = vector.load %arg9[%c1_29, %c0_30] : memref<34x128xf32, #tpu.memory_space<vmem>>, vector<32x128xf32>
    %33 = arith.truncf %32 : vector<32x128xf32> to vector<32x128xbf16>
    %c2_31 = arith.constant 2 : index
    %c0_32 = arith.constant 0 : index
    %34 = vector.load %arg9[%c2_31, %c0_32] : memref<34x128xf32, #tpu.memory_space<vmem>>, vector<32x128xf32>
    %35 = arith.truncf %34 : vector<32x128xf32> to vector<32x128xbf16>
    %c1_33 = arith.constant 1 : index
    %c0_34 = arith.constant 0 : index
    %c0_35 = arith.constant 0 : index
    %36 = vector.load %arg3[%c1_33, %c0_34, %c0_35] : memref<3x128x128xbf16, #tpu.memory_space<vmem>>, vector<1x128x128xbf16>
    %37 = vector.shape_cast %36 : vector<1x128x128xbf16> to vector<128x128xbf16>
    %cst_36 = arith.constant dense<0.000000e+00> : vector<32x128xf32>
    %38 = tpu.matmul %33, %37, %cst_36 {dimension_numbers = #tpu.dot_dimension_numbers<[1], [0], [0], [1], [0, 0, 1, 1], [], []>} : vector<32x128xbf16>, vector<128x128xbf16>, vector<32x128xf32> -> vector<32x128xf32>
    %c0_37 = arith.constant 0 : index
    %c0_38 = arith.constant 0 : index
    %c0_39 = arith.constant 0 : index
    %39 = vector.load %arg3[%c0_37, %c0_38, %c0_39] : memref<3x128x128xbf16, #tpu.memory_space<vmem>>, vector<1x128x128xbf16>
    %40 = vector.shape_cast %39 : vector<1x128x128xbf16> to vector<128x128xbf16>
    %cst_40 = arith.constant dense<0.000000e+00> : vector<32x128xf32>
    %41 = tpu.matmul %31, %40, %cst_40 {dimension_numbers = #tpu.dot_dimension_numbers<[1], [0], [0], [1], [0, 0, 1, 1], [], []>} : vector<32x128xbf16>, vector<128x128xbf16>, vector<32x128xf32> -> vector<32x128xf32>
    %42 = arith.mulf %0, %41 : vector<32x128xf32>
    %43 = arith.addf %38, %42 : vector<32x128xf32>
    %c2_41 = arith.constant 2 : index
    %c0_42 = arith.constant 0 : index
    %c0_43 = arith.constant 0 : index
    %44 = vector.load %arg3[%c2_41, %c0_42, %c0_43] : memref<3x128x128xbf16, #tpu.memory_space<vmem>>, vector<1x128x128xbf16>
    %45 = vector.shape_cast %44 : vector<1x128x128xbf16> to vector<128x128xbf16>
    %cst_44 = arith.constant dense<0.000000e+00> : vector<32x128xf32>
    %46 = tpu.matmul %35, %45, %cst_44 {dimension_numbers = #tpu.dot_dimension_numbers<[1], [0], [0], [1], [0, 0, 1, 1], [], []>} : vector<32x128xbf16>, vector<128x128xbf16>, vector<32x128xf32> -> vector<32x128xf32>
    %47 = arith.mulf %1, %46 : vector<32x128xf32>
    %48 = arith.addf %43, %47 : vector<32x128xf32>
    %c0_45 = arith.constant 0 : index
    %c0_46 = arith.constant 0 : index
    %49 = vector.load %arg5[%c0_45, %c0_46] : memref<1x128xf32, #tpu.memory_space<vmem>>, vector<1x128xf32>
    %50 = vector.broadcast %49 : vector<1x128xf32> to vector<32x128xf32>
    %51 = arith.addf %48, %50 : vector<32x128xf32>
    %cst_47 = arith.constant 0.000000e+00 : f32
    %52 = vector.broadcast %cst_47 : f32 to vector<32x128xf32>
    %53 = arith.maximumf %51, %52 : vector<32x128xf32>
    %c0_48 = arith.constant 0 : index
    %c0_49 = arith.constant 0 : index
    %54 = vector.load %arg8[%c0_48, %c0_49] : memref<32x128xf32, #tpu.memory_space<vmem>>, vector<32x128xf32>
    tpu.vector_store %arg8[%c0_48, %c0_49], %53 {strides = array<i32>} : memref<32x128xf32, #tpu.memory_space<vmem>>, vector<32x128xf32>,
    return
  }
  func.func @transform_0(%arg0: i32) -> (i32, i32) {
    %c0_i32 = arith.constant 0 : i32
    %c0_i32_0 = arith.constant 0 : i32
    %c0_i32_1 = arith.constant 0 : i32
    return %c0_i32, %c0_i32_0 : i32, i32
  }
  func.func @transform_1(%arg0: i32) -> (i32, i32, i32) {
    %c0_i32 = arith.constant 0 : i32
    %c0_i32_0 = arith.constant 0 : i32
    %c0_i32_1 = arith.constant 0 : i32
    %c0_i32_2 = arith.constant 0 : i32
    return %c0_i32, %c0_i32_0, %c0_i32_1 : i32, i32, i32
  }
  func.func @transform_2(%arg0: i32) -> (i32, i32, i32) {
    %c0_i32 = arith.constant 0 : i32
    %c0_i32_0 = arith.constant 0 : i32
    %c0_i32_1 = arith.constant 0 : i32
    %c0_i32_2 = arith.constant 0 : i32
    return %c0_i32, %c0_i32_0, %c0_i32_1 : i32, i32, i32
  }
  func.func @transform_3(%arg0: i32) -> (i32, i32) {
    %c0_i32 = arith.constant 0 : i32
    %c0_i32_0 = arith.constant 0 : i32
    %c0_i32_1 = arith.constant 0 : i32
    return %c0_i32, %c0_i32_0 : i32, i32
  }
  func.func @transform_4(%arg0: i32) -> (i32, i32) {
    %c0_i32 = arith.constant 0 : i32
    %c0_i32_0 = arith.constant 0 : i32
    %c0_i32_1 = arith.constant 0 : i32
    return %c0_i32, %c0_i32_0 : i32, i32
  }
  func.func @transform_5(%arg0: i32) -> (i32, i32) {
    %c0_i32 = arith.constant 0 : i32
    %c0_i32_0 = arith.constant 0 : i32
    %c0_i32_1 = arith.constant 0 : i32
    return %c0_i32, %c0_i32_0 : i32, i32
  }
  func.func @transform_6(%arg0: i32) -> (i32, i32) {
    %c0_i32 = arith.constant 0 : i32
    %c0_i32_0 = arith.constant 0 : i32
    %c0_i32_1 = arith.constant 0 : i32
    return %c0_i32, %c0_i32_0 : i32, i32
  }
  func.func @transform_7(%arg0: i32) -> (i32, i32) {
    %c0_i32 = arith.constant 0 : i32
    %c0_i32_0 = arith.constant 0 : i32
    %c0_i32_1 = arith.constant 0 : i32
    return %c0_i32, %c0_i32_0 : i32, i32
  }
}

</mosaic_0001>

<llo_original>
// kernel: multi_scale_forward.1
$region0: #{multi_scale_forward.1}
  #allocation0 [shape = 'u32[]', space=smem, size = 0x4, offset = 0x4, fixed_abs, tag = 'smem constant byte address 0x4 - core index']
  #allocation1 [shape = 'u32[72,128]{1,0:T(1,128)}', space=vmem, size = 0x9000, scoped, tag = 'internal scratch']
  #allocation2 [shape = 'f32[34,128]{1,0:T(8,128)}', space=vmem, size = 0x5000, scoped, tag = 'scratch operand']
  %s0 = inlined_call_operand.vmem [shape: f32[34,128], index: 0, kind: input, shape index: {}]
  %s1 = inlined_call_operand.vmem [shape: bf16[3,128,128], index: 1, kind: input, shape index: {}]
  %s2 = inlined_call_operand.vmem [shape: bf16[3,128,128], index: 2, kind: input, shape index: {}]
  %s3 = inlined_call_operand.vmem [shape: f32[1,128], index: 3, kind: input, shape index: {}]
  %s4 = inlined_call_operand.vmem [shape: f32[1,128], index: 4, kind: input, shape index: {}]
  %s5 = inlined_call_operand.vmem [shape: f32[32,128], index: 5, kind: input, shape index: {}]
  %s6 = inlined_call_operand.vmem [shape: f32[32,128], index: 6, kind: input, shape index: {}]
  %s7 = inlined_call_operand.vmem [shape: f32[32,128], index: 7, kind: output, shape index: {}]
  %s8 = sld [smem:[#allocation0]]
  $region38: #{multi_scale_forward.1} parent=0
    _
  %s10 = ssub.s32 1, %s8
  %s11 = scalar_select 0, %s10, %s8
  // Predicated region
  $region2: #{multi_scale_forward.1} parent=0 // pred_check
    _
  $region3: #{multi_scale_forward.1} parent=0 // pred_check_branch
    %13 = sbr.rel (0) target = $region5
  $region4: #{multi_scale_forward.1} parent=0 // pred_region
    _
  $region5: #{multi_scale_forward.1} parent=0 // pred_fallthru
    _
  // Predicated region
  $region6: #{multi_scale_forward.1} parent=0 // pred_check
    _
  $region7: #{multi_scale_forward.1} parent=0 // pred_check_branch
    %15 = sbr.rel (0) target = $region9
  $region8: #{multi_scale_forward.1} parent=0 // pred_region
    _
  $region9: #{multi_scale_forward.1} parent=0 // pred_fallthru
    _
  // Predicated region
  $region10: #{multi_scale_forward.1} parent=0 // pred_check
    _
  $region11: #{multi_scale_forward.1} parent=0 // pred_check_branch
    %17 = sbr.rel (0) target = $region13
  $region12: #{multi_scale_forward.1} parent=0 // pred_region
    _
  $region13: #{multi_scale_forward.1} parent=0 // pred_fallthru
    _
  // Predicated region
  $region14: #{multi_scale_forward.1} parent=0 // pred_check
    _
  $region15: #{multi_scale_forward.1} parent=0 // pred_check_branch
    %19 = sbr.rel (0) target = $region17
  $region16: #{multi_scale_forward.1} parent=0 // pred_region
    _
  $region17: #{multi_scale_forward.1} parent=0 // pred_fallthru
    _
  // Predicated region
  $region18: #{multi_scale_forward.1} parent=0 // pred_check
    _
  $region19: #{multi_scale_forward.1} parent=0 // pred_check_branch
    %21 = sbr.rel (0) target = $region21
  $region20: #{multi_scale_forward.1} parent=0 // pred_region
    _
  $region21: #{multi_scale_forward.1} parent=0 // pred_fallthru
    _
  // Predicated region
  $region22: #{multi_scale_forward.1} parent=0 // pred_check
    _
  $region23: #{multi_scale_forward.1} parent=0 // pred_check_branch
    %23 = sbr.rel (0) target = $region25
  $region24: #{multi_scale_forward.1} parent=0 // pred_region
    _
  $region25: #{multi_scale_forward.1} parent=0 // pred_fallthru
    _
  // Predicated region
  $region26: #{multi_scale_forward.1} parent=0 // pred_check
    _
  $region27: #{multi_scale_forward.1} parent=0 // pred_check_branch
    %25 = sbr.rel (0) target = $region29
  $region28: #{multi_scale_forward.1} parent=0 // pred_region
    _
  $region29: #{multi_scale_forward.1} parent=0 // pred_fallthru
    _
  %v26 = vld [vmem:[%s5] sm:$0xff]
  %v27 = vld [vmem:[%s5 + $0x8] sm:$0xff]
  %v28 = vld [vmem:[%s5 + $0x10] sm:$0xff]
  %v29 = vld [vmem:[%s5 + $0x18] sm:$0xff]
  %v30 = vld [vmem:[%s6] sm:$0xff]
  %v31 = vld [vmem:[%s6 + $0x8] sm:$0xff]
  %v32 = vld [vmem:[%s6 + $0x10] sm:$0xff]
  %v33 = vld [vmem:[%s6 + $0x18] sm:$0xff]
  %v34 = vld [vmem:[%s0] sm:$0xff]
  %v35 = vld [vmem:[%s0 + $0x8] sm:$0xff]
  %v36 = vld [vmem:[%s0 + $0x10] sm:$0xff]
  %v37 = vld [vmem:[%s0 + $0x18] sm:$0xff]
  %v38 = vpack.c.bf16 %v35, %v34
  %v39 = vpack.c.bf16 %v37, %v36
  %v40 = vld [vmem:[%s0 + $0x1] sm:$0xff]
  %v41 = vld [vmem:[%s0 + $0x9] sm:$0xff]
  %v42 = vld [vmem:[%s0 + $0x11] sm:$0xff]
  %v43 = vld [vmem:[%s0 + $0x19] sm:$0xff]
  %v44 = vpack.c.bf16 %v41, %v40
  %v45 = vpack.c.bf16 %v43, %v42
  %v46 = vld [vmem:[%s0 + $0x2] sm:$0xff]
  %v47 = vld [vmem:[%s0 + $0xa] sm:$0xff]
  %v48 = vld [vmem:[%s0 + $0x12] sm:$0xff]
  %v49 = vld [vmem:[%s0 + $0x1a] sm:$0xff]
  %v50 = vpack.c.bf16 %v47, %v46
  %v51 = vpack.c.bf16 %v49, %v48
  %s52 = scalar_lea.vmem %s1, 64
  %v53 = vld [vmem:[%s52] sm:$0xf]
  %v54 = vld [vmem:[%s52 + $0x4] sm:$0xf]
  %v55 = vld [vmem:[%s52 + $0x8] sm:$0xf]
  %v56 = vld [vmem:[%s52 + $0xc] sm:$0xf]
  %v57 = vld [vmem:[%s52 + $0x10] sm:$0xf]
  %v58 = vld [vmem:[%s52 + $0x14] sm:$0xf]
  %v59 = vld [vmem:[%s52 + $0x18] sm:$0xf]
  %v60 = vld [vmem:[%s52 + $0x1c] sm:$0xf]
  %v61 = vld [vmem:[%s52 + $0x20] sm:$0xf]
  %v62 = vld [vmem:[%s52 + $0x24] sm:$0xf]
  %v63 = vld [vmem:[%s52 + $0x28] sm:$0xf]
  %v64 = vld [vmem:[%s52 + $0x2c] sm:$0xf]
  %v65 = vld [vmem:[%s52 + $0x30] sm:$0xf]
  %v66 = vld [vmem:[%s52 + $0x34] sm:$0xf]
  %v67 = vld [vmem:[%s52 + $0x38] sm:$0xf]
  %v68 = vld [vmem:[%s52 + $0x3c] sm:$0xf]
  %v69 = vld [vmem:[%s1] sm:$0xf]
  %v70 = vld [vmem:[%s1 + $0x4] sm:$0xf]
  %v71 = vld [vmem:[%s1 + $0x8] sm:$0xf]
  %v72 = vld [vmem:[%s1 + $0xc] sm:$0xf]
  %v73 = vld [vmem:[%s1 + $0x10] sm:$0xf]
  %v74 = vld [vmem:[%s1 + $0x14] sm:$0xf]
  %v75 = vld [vmem:[%s1 + $0x18] sm:$0xf]
  %v76 = vld [vmem:[%s1 + $0x1c] sm:$0xf]
  %v77 = vld [vmem:[%s1 + $0x20] sm:$0xf]
  %v78 = vld [vmem:[%s1 + $0x24] sm:$0xf]
  %v79 = vld [vmem:[%s1 + $0x28] sm:$0xf]
  %v80 = vld [vmem:[%s1 + $0x2c] sm:$0xf]
  %v81 = vld [vmem:[%s1 + $0x30] sm:$0xf]
  %v82 = vld [vmem:[%s1 + $0x34] sm:$0xf]
  %v83 = vld [vmem:[%s1 + $0x38] sm:$0xf]
  %v84 = vld [vmem:[%s1 + $0x3c] sm:$0xf]
  %v101 = vunpack.c.l.b16 %v69
  %v102 = vunpack.c.l.b16 %v70
  %v103 = vunpack.c.l.b16 %v71
  %v104 = vunpack.c.l.b16 %v72
  %v105 = vunpack.c.l.b16 %v73
  %v106 = vunpack.c.l.b16 %v74
  %v107 = vunpack.c.l.b16 %v75
  %v108 = vunpack.c.l.b16 %v76
  %v109 = vunpack.c.l.b16 %v77
  %v110 = vunpack.c.l.b16 %v78
  %v111 = vunpack.c.l.b16 %v79
  %v112 = vunpack.c.l.b16 %v80
  %v113 = vunpack.c.l.b16 %v81
  %v114 = vunpack.c.l.b16 %v82
  %v115 = vunpack.c.l.b16 %v83
  %v116 = vunpack.c.l.b16 %v84
  %v117 = vpack.c.b16 %v102, %v101
  %v118 = vpack.c.b16 %v104, %v103
  %v119 = vpack.c.b16 %v106, %v105
  %v120 = vpack.c.b16 %v108, %v107
  %v121 = vpack.c.b16 %v110, %v109
  %v122 = vpack.c.b16 %v112, %v111
  %v123 = vpack.c.b16 %v114, %v113
  %v124 = vpack.c.b16 %v116, %v115
  %133 = vmatpush.bf16.msra.mxu0 %v124
  %134 = vmatpush.bf16.msra.mxu0 %v123
  %135 = vmatpush.bf16.msra.mxu0 %v122
  %136 = vmatpush.bf16.msra.mxu0 %v121
  %137 = vmatpush.bf16.msra.mxu0 %v120
  %138 = vmatpush.bf16.msra.mxu0 %v119
  %139 = vmatpush.bf16.msra.mxu0 %v118
  %140 = vmatpush.bf16.msra.mxu0 %v117
  %141 = vmatmul.bf16.gmra.mxu0 %v38
  %v142 = vpop.f32.mrf.mxu0
  %v143 = vadd.f32 0.0, %v142
  %v144 = vpop.f32.mrf.mxu0
  %v145 = vadd.f32 0.0, %v144
  %146 = vmatmul.bf16.gmra.mxu0 %v39
  %v147 = vpop.f32.mrf.mxu0
  %v148 = vadd.f32 0.0, %v147
  %v149 = vpop.f32.mrf.mxu0
  %v150 = vadd.f32 0.0, %v149
  %151 = vdwg.mxu0
  %v152 = vmul.f32 %v26, %v143
  %v153 = vmul.f32 %v27, %v145
  %v154 = vmul.f32 %v28, %v148
  %v155 = vmul.f32 %v29, %v150
  %v172 = vunpack.c.l.b16 %v53
  %v173 = vunpack.c.l.b16 %v54
  %v174 = vunpack.c.l.b16 %v55
  %v175 = vunpack.c.l.b16 %v56
  %v176 = vunpack.c.l.b16 %v57
  %v177 = vunpack.c.l.b16 %v58
  %v178 = vunpack.c.l.b16 %v59
  %v179 = vunpack.c.l.b16 %v60
  %v180 = vunpack.c.l.b16 %v61
  %v181 = vunpack.c.l.b16 %v62
  %v182 = vunpack.c.l.b16 %v63
  %v183 = vunpack.c.l.b16 %v64
  %v184 = vunpack.c.l.b16 %v65
  %v185 = vunpack.c.l.b16 %v66
  %v186 = vunpack.c.l.b16 %v67
  %v187 = vunpack.c.l.b16 %v68
  %v188 = vpack.c.b16 %v173, %v172
  %v189 = vpack.c.b16 %v175, %v174
  %v190 = vpack.c.b16 %v177, %v176
  %v191 = vpack.c.b16 %v179, %v178
  %v192 = vpack.c.b16 %v181, %v180
  %v193 = vpack.c.b16 %v183, %v182
  %v194 = vpack.c.b16 %v185, %v184
  %v195 = vpack.c.b16 %v187, %v186
  %204 = vmatpush.bf16.msra.mxu0 %v195
  %205 = vmatpush.bf16.msra.mxu0 %v194
  %206 = vmatpush.bf16.msra.mxu0 %v193
  %207 = vmatpush.bf16.msra.mxu0 %v192
  %208 = vmatpush.bf16.msra.mxu0 %v191
  %209 = vmatpush.bf16.msra.mxu0 %v190
  %210 = vmatpush.bf16.msra.mxu0 %v189
  %211 = vmatpush.bf16.msra.mxu0 %v188
  %212 = vmatmul.bf16.gmra.mxu0 %v44
  %v213 = vpop.f32.mrf.mxu0
  %v214 = vadd.f32 %v152, %v213
  %v215 = vpop.f32.mrf.mxu0
  %v216 = vadd.f32 %v153, %v215
  %217 = vmatmul.bf16.gmra.mxu0 %v45
  %v218 = vpop.f32.mrf.mxu0
  %v219 = vadd.f32 %v154, %v218
  %v220 = vpop.f32.mrf.mxu0
  %v221 = vadd.f32 %v155, %v220
  %222 = vdwg.mxu0
  %s223 = scalar_lea.vmem %s1, 128
  %v224 = vld [vmem:[%s223] sm:$0xf]
  %v225 = vld [vmem:[%s223 + $0x4] sm:$0xf]
  %v226 = vld [vmem:[%s223 + $0x8] sm:$0xf]
  %v227 = vld [vmem:[%s223 + $0xc] sm:$0xf]
  %v228 = vld [vmem:[%s223 + $0x10] sm:$0xf]
  %v229 = vld [vmem:[%s223 + $0x14] sm:$0xf]
  %v230 = vld [vmem:[%s223 + $0x18] sm:$0xf]
  %v231 = vld [vmem:[%s223 + $0x1c] sm:$0xf]
  %v232 = vld [vmem:[%s223 + $0x20] sm:$0xf]
  %v233 = vld [vmem:[%s223 + $0x24] sm:$0xf]
  %v234 = vld [vmem:[%s223 + $0x28] sm:$0xf]
  %v235 = vld [vmem:[%s223 + $0x2c] sm:$0xf]
  %v236 = vld [vmem:[%s223 + $0x30] sm:$0xf]
  %v237 = vld [vmem:[%s223 + $0x34] sm:$0xf]
  %v238 = vld [vmem:[%s223 + $0x38] sm:$0xf]
  %v239 = vld [vmem:[%s223 + $0x3c] sm:$0xf]
  %v256 = vunpack.c.l.b16 %v224
  %v257 = vunpack.c.l.b16 %v225
  %v258 = vunpack.c.l.b16 %v226
  %v259 = vunpack.c.l.b16 %v227
  %v260 = vunpack.c.l.b16 %v228
  %v261 = vunpack.c.l.b16 %v229
  %v262 = vunpack.c.l.b16 %v230
  %v263 = vunpack.c.l.b16 %v231
  %v264 = vunpack.c.l.b16 %v232
  %v265 = vunpack.c.l.b16 %v233
  %v266 = vunpack.c.l.b16 %v234
  %v267 = vunpack.c.l.b16 %v235
  %v268 = vunpack.c.l.b16 %v236
  %v269 = vunpack.c.l.b16 %v237
  %v270 = vunpack.c.l.b16 %v238
  %v271 = vunpack.c.l.b16 %v239
  %v272 = vpack.c.b16 %v257, %v256
  %v273 = vpack.c.b16 %v259, %v258
  %v274 = vpack.c.b16 %v261, %v260
  %v275 = vpack.c.b16 %v263, %v262
  %v276 = vpack.c.b16 %v265, %v264
  %v277 = vpack.c.b16 %v267, %v266
  %v278 = vpack.c.b16 %v269, %v268
  %v279 = vpack.c.b16 %v271, %v270
  %288 = vmatpush.bf16.msra.mxu0 %v279
  %289 = vmatpush.bf16.msra.mxu0 %v278
  %290 = vmatpush.bf16.msra.mxu0 %v277
  %291 = vmatpush.bf16.msra.mxu0 %v276
  %292 = vmatpush.bf16.msra.mxu0 %v275
  %293 = vmatpush.bf16.msra.mxu0 %v274
  %294 = vmatpush.bf16.msra.mxu0 %v273
  %295 = vmatpush.bf16.msra.mxu0 %v272
  %296 = vmatmul.bf16.gmra.mxu0 %v50
  %v297 = vpop.f32.mrf.mxu0
  %v298 = vadd.f32 0.0, %v297
  %v299 = vpop.f32.mrf.mxu0
  %v300 = vadd.f32 0.0, %v299
  %301 = vmatmul.bf16.gmra.mxu0 %v51
  %v302 = vpop.f32.mrf.mxu0
  %v303 = vadd.f32 0.0, %v302
  %v304 = vpop.f32.mrf.mxu0
  %v305 = vadd.f32 0.0, %v304
  %306 = vdwg.mxu0
  %v307 = vmul.f32 %v30, %v298
  %v308 = vmul.f32 %v31, %v300
  %v309 = vmul.f32 %v32, %v303
  %v310 = vmul.f32 %v33, %v305
  %v311 = vadd.f32 %v214, %v307
  %v312 = vadd.f32 %v216, %v308
  %v313 = vadd.f32 %v219, %v309
  %v314 = vadd.f32 %v221, %v310
  %v315 = vld [vmem:[%s3] sm:$0x1]
  %v317 = vperm.slane %v315, 0
  %v319 = vadd.f32 %v311, %v317
  %v320 = vadd.f32 %v312, %v317
  %v321 = vadd.f32 %v313, %v317
  %v322 = vadd.f32 %v314, %v317
  %v323 = vmax.f32 %v319, 0.0
  %v324 = vmax.f32 %v320, 0.0
  %v325 = vmax.f32 %v321, 0.0
  %v326 = vmax.f32 %v322, 0.0
  %327 = vst [vmem:[#allocation2] sm:$0x1] 0.0
  %328 = vst [vmem:[#allocation2 + $0x21] sm:$0x1] 0.0
  %329 = vst [vmem:[#allocation2 + $0x1] sm:$0xff] %v323
  %330 = vst [vmem:[#allocation2 + $0x9] sm:$0xff] %v324
  %331 = vst [vmem:[#allocation2 + $0x11] sm:$0xff] %v325
  %332 = vst [vmem:[#allocation2 + $0x19] sm:$0xff] %v326
  %v333 = vld [vmem:[#allocation2] sm:$0xff]
  %v334 = vld [vmem:[#allocation2 + $0x8] sm:$0xff]
  %v335 = vld [vmem:[#allocation2 + $0x10] sm:$0xff]
  %v336 = vld [vmem:[#allocation2 + $0x18] sm:$0xff]
  %v337 = vpack.c.bf16 %v334, %v333
  %v338 = vpack.c.bf16 %v336, %v335
  %v339 = vld [vmem:[#allocation2 + $0x1] sm:$0xff]
  %v340 = vld [vmem:[#allocation2 + $0x9] sm:$0xff]
  %v341 = vld [vmem:[#allocation2 + $0x11] sm:$0xff]
  %v342 = vld [vmem:[#allocation2 + $0x19] sm:$0xff]
  %v343 = vpack.c.bf16 %v340, %v339
  %v344 = vpack.c.bf16 %v342, %v341
  %v345 = vld [vmem:[#allocation2 + $0x2] sm:$0xff]
  %v346 = vld [vmem:[#allocation2 + $0xa] sm:$0xff]
  %v347 = vld [vmem:[#allocation2 + $0x12] sm:$0xff]
  %v348 = vld [vmem:[#allocation2 + $0x1a] sm:$0xff]
  %v349 = vpack.c.bf16 %v346, %v345
  %v350 = vpack.c.bf16 %v348, %v347
  %s351 = scalar_lea.vmem %s2, 64
  %v352 = vld [vmem:[%s351] sm:$0xf]
  %v353 = vld [vmem:[%s351 + $0x4] sm:$0xf]
  %v354 = vld [vmem:[%s351 + $0x8] sm:$0xf]
  %v355 = vld [vmem:[%s351 + $0xc] sm:$0xf]
  %v356 = vld [vmem:[%s351 + $0x10] sm:$0xf]
  %v357 = vld [vmem:[%s351 + $0x14] sm:$0xf]
  %v358 = vld [vmem:[%s351 + $0x18] sm:$0xf]
  %v359 = vld [vmem:[%s351 + $0x1c] sm:$0xf]
  %v360 = vld [vmem:[%s351 + $0x20] sm:$0xf]
  %v361 = vld [vmem:[%s351 + $0x24] sm:$0xf]
  %v362 = vld [vmem:[%s351 + $0x28] sm:$0xf]
  %v363 = vld [vmem:[%s351 + $0x2c] sm:$0xf]
  %v364 = vld [vmem:[%s351 + $0x30] sm:$0xf]
  %v365 = vld [vmem:[%s351 + $0x34] sm:$0xf]
  %v366 = vld [vmem:[%s351 + $0x38] sm:$0xf]
  %v367 = vld [vmem:[%s351 + $0x3c] sm:$0xf]
  %v368 = vld [vmem:[%s2] sm:$0xf]
  %v369 = vld [vmem:[%s2 + $0x4] sm:$0xf]
  %v370 = vld [vmem:[%s2 + $0x8] sm:$0xf]
  %v371 = vld [vmem:[%s2 + $0xc] sm:$0xf]
  %v372 = vld [vmem:[%s2 + $0x10] sm:$0xf]
  %v373 = vld [vmem:[%s2 + $0x14] sm:$0xf]
  %v374 = vld [vmem:[%s2 + $0x18] sm:$0xf]
  %v375 = vld [vmem:[%s2 + $0x1c] sm:$0xf]
  %v376 = vld [vmem:[%s2 + $0x20] sm:$0xf]
  %v377 = vld [vmem:[%s2 + $0x24] sm:$0xf]
  %v378 = vld [vmem:[%s2 + $0x28] sm:$0xf]
  %v379 = vld [vmem:[%s2 + $0x2c] sm:$0xf]
  %v380 = vld [vmem:[%s2 + $0x30] sm:$0xf]
  %v381 = vld [vmem:[%s2 + $0x34] sm:$0xf]
  %v382 = vld [vmem:[%s2 + $0x38] sm:$0xf]
  %v383 = vld [vmem:[%s2 + $0x3c] sm:$0xf]
  %v400 = vunpack.c.l.b16 %v368
  %v401 = vunpack.c.l.b16 %v369
  %v402 = vunpack.c.l.b16 %v370
  %v403 = vunpack.c.l.b16 %v371
  %v404 = vunpack.c.l.b16 %v372
  %v405 = vunpack.c.l.b16 %v373
  %v406 = vunpack.c.l.b16 %v374
  %v407 = vunpack.c.l.b16 %v375
  %v408 = vunpack.c.l.b16 %v376
  %v409 = vunpack.c.l.b16 %v377
  %v410 = vunpack.c.l.b16 %v378
  %v411 = vunpack.c.l.b16 %v379
  %v412 = vunpack.c.l.b16 %v380
  %v413 = vunpack.c.l.b16 %v381
  %v414 = vunpack.c.l.b16 %v382
  %v415 = vunpack.c.l.b16 %v383
  %v416 = vpack.c.b16 %v401, %v400
  %v417 = vpack.c.b16 %v403, %v402
  %v418 = vpack.c.b16 %v405, %v404
  %v419 = vpack.c.b16 %v407, %v406
  %v420 = vpack.c.b16 %v409, %v408
  %v421 = vpack.c.b16 %v411, %v410
  %v422 = vpack.c.b16 %v413, %v412
  %v423 = vpack.c.b16 %v415, %v414
  %432 = vmatpush.bf16.msra.mxu0 %v423
  %433 = vmatpush.bf16.msra.mxu0 %v422
  %434 = vmatpush.bf16.msra.mxu0 %v421
  %435 = vmatpush.bf16.msra.mxu0 %v420
  %436 = vmatpush.bf16.msra.mxu0 %v419
  %437 = vmatpush.bf16.msra.mxu0 %v418
  %438 = vmatpush.bf16.msra.mxu0 %v417
  %439 = vmatpush.bf16.msra.mxu0 %v416
  %440 = vmatmul.bf16.gmra.mxu0 %v337
  %v441 = vpop.f32.mrf.mxu0
  %v442 = vadd.f32 0.0, %v441
  %v443 = vpop.f32.mrf.mxu0
  %v444 = vadd.f32 0.0, %v443
  %445 = vmatmul.bf16.gmra.mxu0 %v338
  %v446 = vpop.f32.mrf.mxu0
  %v447 = vadd.f32 0.0, %v446
  %v448 = vpop.f32.mrf.mxu0
  %v449 = vadd.f32 0.0, %v448
  %450 = vdwg.mxu0
  %v451 = vmul.f32 %v26, %v442
  %v452 = vmul.f32 %v27, %v444
  %v453 = vmul.f32 %v28, %v447
  %v454 = vmul.f32 %v29, %v449
  %v471 = vunpack.c.l.b16 %v352
  %v472 = vunpack.c.l.b16 %v353
  %v473 = vunpack.c.l.b16 %v354
  %v474 = vunpack.c.l.b16 %v355
  %v475 = vunpack.c.l.b16 %v356
  %v476 = vunpack.c.l.b16 %v357
  %v477 = vunpack.c.l.b16 %v358
  %v478 = vunpack.c.l.b16 %v359
  %v479 = vunpack.c.l.b16 %v360
  %v480 = vunpack.c.l.b16 %v361
  %v481 = vunpack.c.l.b16 %v362
  %v482 = vunpack.c.l.b16 %v363
  %v483 = vunpack.c.l.b16 %v364
  %v484 = vunpack.c.l.b16 %v365
  %v485 = vunpack.c.l.b16 %v366
  %v486 = vunpack.c.l.b16 %v367
  %v487 = vpack.c.b16 %v472, %v471
  %v488 = vpack.c.b16 %v474, %v473
  %v489 = vpack.c.b16 %v476, %v475
  %v490 = vpack.c.b16 %v478, %v477
  %v491 = vpack.c.b16 %v480, %v479
  %v492 = vpack.c.b16 %v482, %v481
  %v493 = vpack.c.b16 %v484, %v483
  %v494 = vpack.c.b16 %v486, %v485
  %503 = vmatpush.bf16.msra.mxu0 %v494
  %504 = vmatpush.bf16.msra.mxu0 %v493
  %505 = vmatpush.bf16.msra.mxu0 %v492
  %506 = vmatpush.bf16.msra.mxu0 %v491
  %507 = vmatpush.bf16.msra.mxu0 %v490
  %508 = vmatpush.bf16.msra.mxu0 %v489
  %509 = vmatpush.bf16.msra.mxu0 %v488
  %510 = vmatpush.bf16.msra.mxu0 %v487
  %511 = vmatmul.bf16.gmra.mxu0 %v343
  %v512 = vpop.f32.mrf.mxu0
  %v513 = vadd.f32 %v451, %v512
  %v514 = vpop.f32.mrf.mxu0
  %v515 = vadd.f32 %v452, %v514
  %516 = vmatmul.bf16.gmra.mxu0 %v344
  %v517 = vpop.f32.mrf.mxu0
  %v518 = vadd.f32 %v453, %v517
  %v519 = vpop.f32.mrf.mxu0
  %v520 = vadd.f32 %v454, %v519
  %521 = vdwg.mxu0
  %s522 = scalar_lea.vmem %s2, 128
  %v523 = vld [vmem:[%s522] sm:$0xf]
  %v524 = vld [vmem:[%s522 + $0x4] sm:$0xf]
  %v525 = vld [vmem:[%s522 + $0x8] sm:$0xf]
  %v526 = vld [vmem:[%s522 + $0xc] sm:$0xf]
  %v527 = vld [vmem:[%s522 + $0x10] sm:$0xf]
  %v528 = vld [vmem:[%s522 + $0x14] sm:$0xf]
  %v529 = vld [vmem:[%s522 + $0x18] sm:$0xf]
  %v530 = vld [vmem:[%s522 + $0x1c] sm:$0xf]
  %v531 = vld [vmem:[%s522 + $0x20] sm:$0xf]
  %v532 = vld [vmem:[%s522 + $0x24] sm:$0xf]
  %v533 = vld [vmem:[%s522 + $0x28] sm:$0xf]
  %v534 = vld [vmem:[%s522 + $0x2c] sm:$0xf]
  %v535 = vld [vmem:[%s522 + $0x30] sm:$0xf]
  %v536 = vld [vmem:[%s522 + $0x34] sm:$0xf]
  %v537 = vld [vmem:[%s522 + $0x38] sm:$0xf]
  %v538 = vld [vmem:[%s522 + $0x3c] sm:$0xf]
  %v555 = vunpack.c.l.b16 %v523
  %v556 = vunpack.c.l.b16 %v524
  %v557 = vunpack.c.l.b16 %v525
  %v558 = vunpack.c.l.b16 %v526
  %v559 = vunpack.c.l.b16 %v527
  %v560 = vunpack.c.l.b16 %v528
  %v561 = vunpack.c.l.b16 %v529
  %v562 = vunpack.c.l.b16 %v530
  %v563 = vunpack.c.l.b16 %v531
  %v564 = vunpack.c.l.b16 %v532
  %v565 = vunpack.c.l.b16 %v533
  %v566 = vunpack.c.l.b16 %v534
  %v567 = vunpack.c.l.b16 %v535
  %v568 = vunpack.c.l.b16 %v536
  %v569 = vunpack.c.l.b16 %v537
  %v570 = vunpack.c.l.b16 %v538
  %v571 = vpack.c.b16 %v556, %v555
  %v572 = vpack.c.b16 %v558, %v557
  %v573 = vpack.c.b16 %v560, %v559
  %v574 = vpack.c.b16 %v562, %v561
  %v575 = vpack.c.b16 %v564, %v563
  %v576 = vpack.c.b16 %v566, %v565
  %v577 = vpack.c.b16 %v568, %v567
  %v578 = vpack.c.b16 %v570, %v569
  %587 = vmatpush.bf16.msra.mxu0 %v578
  %588 = vmatpush.bf16.msra.mxu0 %v577
  %589 = vmatpush.bf16.msra.mxu0 %v576
  %590 = vmatpush.bf16.msra.mxu0 %v575
  %591 = vmatpush.bf16.msra.mxu0 %v574
  %592 = vmatpush.bf16.msra.mxu0 %v573
  %593 = vmatpush.bf16.msra.mxu0 %v572
  %594 = vmatpush.bf16.msra.mxu0 %v571
  %595 = vmatmul.bf16.gmra.mxu0 %v349
  %v596 = vpop.f32.mrf.mxu0
  %v597 = vadd.f32 0.0, %v596
  %v598 = vpop.f32.mrf.mxu0
  %v599 = vadd.f32 0.0, %v598
  %600 = vmatmul.bf16.gmra.mxu0 %v350
  %v601 = vpop.f32.mrf.mxu0
  %v602 = vadd.f32 0.0, %v601
  %v603 = vpop.f32.mrf.mxu0
  %v604 = vadd.f32 0.0, %v603
  %605 = vdwg.mxu0
  %v606 = vmul.f32 %v30, %v597
  %v607 = vmul.f32 %v31, %v599
  %v608 = vmul.f32 %v32, %v602
  %v609 = vmul.f32 %v33, %v604
  %v610 = vadd.f32 %v513, %v606
  %v611 = vadd.f32 %v515, %v607
  %v612 = vadd.f32 %v518, %v608
  %v613 = vadd.f32 %v520, %v609
  %v614 = vld [vmem:[%s4] sm:$0x1]
  %v616 = vperm.slane %v614, 0
  %v618 = vadd.f32 %v610, %v616
  %v619 = vadd.f32 %v611, %v616
  %v620 = vadd.f32 %v612, %v616
  %v621 = vadd.f32 %v613, %v616
  %v622 = vmax.f32 %v618, 0.0
  %v623 = vmax.f32 %v619, 0.0
  %v624 = vmax.f32 %v620, 0.0
  %v625 = vmax.f32 %v621, 0.0
  %626 = vst [vmem:[%s7] sm:$0xff] %v622
  %627 = vst [vmem:[%s7 + $0x8] sm:$0xff] %v623
  %628 = vst [vmem:[%s7 + $0x10] sm:$0xff] %v624
  %629 = vst [vmem:[%s7 + $0x18] sm:$0xff] %v625
  // Predicated region
  $region30: #{multi_scale_forward.1} parent=0 // pred_check
    _
  $region31: #{multi_scale_forward.1} parent=0 // pred_check_branch
    %631 = sbr.rel (0) target = $region33
  $region32: #{multi_scale_forward.1} parent=0 // pred_region
    _
  $region33: #{multi_scale_forward.1} parent=0 // pred_fallthru
    _
  // Predicated region
  $region34: #{multi_scale_forward.1} parent=0 // pred_check
    _
  $region35: #{multi_scale_forward.1} parent=0 // pred_check_branch
    %633 = sbr.rel (0) target = $region37
  $region36: #{multi_scale_forward.1} parent=0 // pred_region
    _
  $region37: #{multi_scale_forward.1} parent=0 // pred_fallthru
    _

</llo_original>
